<compile_context>
chip_gen: v7x
topology: tpu7x:2x2x1
jax: 0.10.0
libtpu: 0.0.40
codegen_flags: <defaults>
</compile_context>

<pallas_src>
import functools

import jax
import jax.numpy as jnp
from jax.experimental import pallas as pl
from jax.experimental.pallas import tpu as pltpu


def _gemma_rmsnorm_kernel(x_ref, w_ref, o_ref, *, eps: float):
    # x_ref: (tile_rows, H) block; w_ref: (1, H) weight (broadcast over rows)
    x = x_ref[...].astype(jnp.float32)
    ms = jnp.mean(x * x, axis=-1, keepdims=True)   # lane reduction -> XLU
    inv = jax.lax.rsqrt(ms + eps)                  # EUP
    w = w_ref[...].astype(jnp.float32)
    o_ref[...] = ((x * inv) * (1.0 + w)).astype(o_ref.dtype)


def _vmem_capacity_bytes() -> int:
    """Per-core VMEM capacity; conservative fallback = v7x's 64 MiB per TC."""
    try:
        return int(pltpu.get_tpu_info().vmem_capacity_bytes)
    except Exception:
        return 64 * 1024 * 1024


def _round_up(x: int, m: int) -> int:
    return ((x + m - 1) // m) * m


def gemma_rms_norm(x: jax.Array, weight: jax.Array, eps: float = 1e-6) -> jax.Array:
    """x: (..., H); weight: (H,). Returns same shape/dtype as x."""
    orig_shape = x.shape
    H = orig_shape[-1]
    x2d = x.reshape(-1, H)
    M = x2d.shape[0]
    itemsize = jnp.dtype(x.dtype).itemsize

    vmem_cap = _vmem_capacity_bytes()

    # dtype-specific sublane pack: f32 -> 8 rows, bf16 -> 16, int8/fp8 -> 32.
    pack = max(8, 32 // max(1, itemsize))

    # Byte-budgeted row tile: ~4 MiB blocks on 128 MiB-VMEM chips (v5e/v6e),
    # ~3 MiB on 64 MiB-VMEM chips (v7x).
    target_block_bytes = (4 << 20) if vmem_cap >= (128 << 20) else (3 << 20)
    row_bytes = max(1, H * itemsize)
    tile_rows = max(pack, (target_block_bytes // row_bytes) // pack * pack)
    tile_rows = min(tile_rows, _round_up(M, pack))

    grid = (pl.cdiv(M, tile_rows),)  # ragged tail handled by Pallas padding

    # VMEM budget: double-buffered input + output blocks, weight, headroom;
    # strictly capped at ~75% of per-core VMEM (<=48 MiB on v7x).
    block_bytes = tile_rows * H * itemsize
    w_bytes = H * jnp.dtype(weight.dtype).itemsize
    vmem_limit = 4 * block_bytes + w_bytes + (4 << 20)
    vmem_limit = min(max(vmem_limit, 16 << 20), vmem_cap * 3 // 4)

    w2d = weight.reshape(1, H)
    kernel = functools.partial(_gemma_rmsnorm_kernel, eps=eps)

    out2d = pl.pallas_call(
        kernel,
        out_shape=jax.ShapeDtypeStruct((M, H), x.dtype),
        grid_spec=pltpu.PrefetchScalarGridSpec(
            num_scalar_prefetch=0,
            grid=grid,
            in_specs=[
                pl.BlockSpec((tile_rows, H), lambda i: (i, 0)),
                pl.BlockSpec((1, H), lambda i: (0, 0)),
            ],
            out_specs=pl.BlockSpec((tile_rows, H), lambda i: (i, 0)),
        ),
        compiler_params=pltpu.CompilerParams(
            dimension_semantics=("parallel",),
            vmem_limit_bytes=int(vmem_limit),
        ),
    )(x2d, w2d)

    return out2d.reshape(orig_shape)


def gemma_rms_norm_ref(x, weight, eps=1e-6):
    xf = x.astype(jnp.float32)
    inv = jax.lax.rsqrt(jnp.mean(xf * xf, axis=-1, keepdims=True) + eps)
    out = xf * inv * (1.0 + weight.astype(jnp.float32))
    return out.astype(x.dtype)


if __name__ == "__main__":
    B, S, H = 2, 8, 32
    eps = 1e-6

    key = jax.random.PRNGKey(0)
    kx, kw = jax.random.split(key)
    x = jax.random.normal(kx, (B, S, H), dtype=jnp.float32)

    # Deterministic parameter init: module __init__ uses torch.ones(hidden_size)
    weight = jnp.ones((H,), dtype=jnp.float32)

    out = gemma_rms_norm(x, weight, eps)
    out = jax.block_until_ready(out)
    ref = gemma_rms_norm_ref(x, weight, eps)
    assert out.shape == x.shape and out.dtype == x.dtype
    assert jnp.allclose(out, ref, atol=1e-5, rtol=1e-5), "mismatch vs reference (ones weight)"

    # Extra correctness check with a non-trivial weight (still deterministic).
    weight2 = 0.1 * jax.random.normal(kw, (H,), dtype=jnp.float32)
    out2 = jax.block_until_ready(gemma_rms_norm(x, weight2, eps))
    ref2 = gemma_rms_norm_ref(x, weight2, eps)
    assert jnp.allclose(out2, ref2, atol=1e-5, rtol=1e-5), "mismatch vs reference (random weight)"

    print("KERNEL_OK")
</pallas_src>

<mosaic_0001>
module attributes {stable_mosaic.version = 11 : i64} {
  func.func @_gemma_rmsnorm_kernel(%arg0: i32, %arg1: memref<16x32xf32, #tpu.memory_space<vmem>>, %arg2: memref<1x32xf32, #tpu.memory_space<vmem>>, %arg3: memref<16x32xf32, #tpu.memory_space<vmem>>) attributes {dimension_semantics = [#tpu.dimension_semantics<parallel>], iteration_bounds = array<i64: 1>, scalar_prefetch = 0 : i64, scratch_operands = 0 : i64, tpu.core_type = #tpu.core_type<tc>, window_params = [{transform_indices = @transform_0, window_bounds = array<i64: 16, 32>}, {pipeline_mode = #tpu.pipeline_mode<synchronous>, transform_indices = @transform_1, window_bounds = array<i64: 1, 32>}, {transform_indices = @transform_2, window_bounds = array<i64: 16, 32>}]} {
    %c0 = arith.constant 0 : index
    %c0_0 = arith.constant 0 : index
    %0 = vector.load %arg1[%c0, %c0_0] : memref<16x32xf32, #tpu.memory_space<vmem>>, vector<16x32xf32>
    %1 = arith.mulf %0, %0 : vector<16x32xf32>
    %cst = arith.constant dense<0.000000e+00> : vector<16xf32>
    %2 = vector.multi_reduction <add>, %1, %cst [1] : vector<16x32xf32> to vector<16xf32>
    %3 = vector.shape_cast %2 : vector<16xf32> to vector<16x1xf32>
    %cst_1 = arith.constant 3.200000e+01 : f32
    %4 = vector.broadcast %cst_1 : f32 to vector<16x1xf32>
    %5 = arith.divf %3, %4 : vector<16x1xf32>
    %cst_2 = arith.constant 9.99999997E-7 : f32
    %6 = vector.broadcast %cst_2 : f32 to vector<16x1xf32>
    %7 = arith.addf %5, %6 : vector<16x1xf32>
    %8 = math.rsqrt %7 : vector<16x1xf32>
    %c0_3 = arith.constant 0 : index
    %c0_4 = arith.constant 0 : index
    %9 = vector.load %arg2[%c0_3, %c0_4] : memref<1x32xf32, #tpu.memory_space<vmem>>, vector<1x32xf32>
    %10 = vector.broadcast %8 : vector<16x1xf32> to vector<16x32xf32>
    %11 = arith.mulf %0, %10 : vector<16x32xf32>
    %cst_5 = arith.constant 1.000000e+00 : f32
    %12 = vector.broadcast %cst_5 : f32 to vector<1x32xf32>
    %13 = arith.addf %12, %9 : vector<1x32xf32>
    %14 = vector.broadcast %13 : vector<1x32xf32> to vector<16x32xf32>
    %15 = arith.mulf %11, %14 : vector<16x32xf32>
    %c0_6 = arith.constant 0 : index
    %c0_7 = arith.constant 0 : index
    %16 = vector.load %arg3[%c0_6, %c0_7] : memref<16x32xf32, #tpu.memory_space<vmem>>, vector<16x32xf32>
    tpu.vector_store %arg3[%c0_6, %c0_7], %15 {strides = array<i32>} : memref<16x32xf32, #tpu.memory_space<vmem>>, vector<16x32xf32>,
    return
  }
  func.func @transform_0(%arg0: i32) -> (i32, i32) {
    %c0_i32 = arith.constant 0 : i32
    %c0_i32_0 = arith.constant 0 : i32
    return %arg0, %c0_i32 : i32, i32
  }
  func.func @transform_1(%arg0: i32) -> (i32, i32) {
    %c0_i32 = arith.constant 0 : i32
    %c0_i32_0 = arith.constant 0 : i32
    %c0_i32_1 = arith.constant 0 : i32
    return %c0_i32, %c0_i32_0 : i32, i32
  }
  func.func @transform_2(%arg0: i32) -> (i32, i32) {
    %c0_i32 = arith.constant 0 : i32
    %c0_i32_0 = arith.constant 0 : i32
    return %arg0, %c0_i32 : i32, i32
  }
}

</mosaic_0001>

<llo_original>
// kernel: tpu_custom_call.1
$region0: #{tpu_custom_call.1}
  #allocation0 [shape = 'u32[]', space=smem, size = 0x4, offset = 0x4, fixed_abs, tag = 'smem constant byte address 0x4 - core index']
  #allocation1 [shape = 'u32[144,128]{1,0:T(1,128)}', space=vmem, size = 0x12000, scoped, tag = 'internal scratch']
  %s0 = inlined_call_operand.hbm [shape: f32[16,32], index: 0, kind: input, shape index: {}]
  %s1 = inlined_call_operand.vmem [shape: f32[1,32], index: 1, kind: input, shape index: {}]
  %s2 = inlined_call_operand.hbm [shape: f32[16,32], index: 2, kind: output, shape index: {}]
  %s3 = sld [smem:[#allocation0]]
  $region22: #{tpu_custom_call.1} parent=0
    _
  %s5 = ssub.s32 1, %s3
  %s6 = scalar_select 0, %s5, %s3
  $region1: #{tpu_custom_call.1} parent=0
    #allocation2 [shape = 'u8[8192]{0}', space=vmem, size = 0x2000, scoped, tag = 'input window, operand 0, single buffered']
    #allocation3 [shape = 's32[1]{0}', space=sflag, size = 0x4, scoped, tag = 'scoped memory for tpu_custom_call.1']
    #allocation4 [shape = 's32[1]{0}', space=sflag, size = 0x4, scoped, tag = 'scoped memory for tpu_custom_call.1']
    #allocation5 [shape = 'u8[8192]{0}', space=vmem, size = 0x2000, scoped, tag = 'output window, operand 0, single buffered']
    %7 = vsyncpa [#allocation3], 0
    %8 = vsyncpa [#allocation4], 0
    // Predicated region
    $region2: #{tpu_custom_call.1} parent=1 // pred_check
      _
    $region3: #{tpu_custom_call.1} parent=1 // pred_check_branch
      %10 = sbr.rel (0) target = $region5
    $region4: #{tpu_custom_call.1} parent=1 // pred_region
      %s12 = ssub.s32 256, 256
      %13 = vsyncadd [#allocation3], %s12
      %s14 = sshll.u32 [#allocation2], 4
      %s15 = int_to_ptr.vmem [resolvable:$true] %s14
      %20 = dma.hbm_to_vmem [thread:$0]  %s0, 256, %s15, [#allocation3], 128, 128, 8
    $region5: #{tpu_custom_call.1} parent=1 // pred_fallthru
      _
    // Predicated region
    $region6: #{tpu_custom_call.1} parent=1 // pred_check
      _
    $region7: #{tpu_custom_call.1} parent=1 // pred_check_branch
      %22 = sbr.rel (0) target = $region9
    $region8: #{tpu_custom_call.1} parent=1 // pred_region
      _
    $region9: #{tpu_custom_call.1} parent=1 // pred_fallthru
      _
    // Predicated region
    $region10: #{tpu_custom_call.1} parent=1 // pred_check
      _
    $region11: #{tpu_custom_call.1} parent=1 // pred_check_branch
      %24 = sbr.rel (0) target = $region13
    $region12: #{tpu_custom_call.1} parent=1 // pred_region
      %25 = dma.done [#allocation3], 256
    $region13: #{tpu_custom_call.1} parent=1 // pred_fallthru
      _
    %v26 = vld [vmem:[#allocation2] sm:$0xff]
    %v27 = vld [vmem:[#allocation2 + $0x8] sm:$0xff]
    %v28 = vmul.f32 %v26, %v26
    %v29 = vmul.f32 %v27, %v27
    %vm30 = vcmask 261120
    %v31 = vsel %vm30, %v28, 0.0
    %32 = vadd.xlane.f32.xlu0 %v31
    %v33 = vpop.xlane.xlu0 %32
    %v34 = vsel %vm30, %v29, 0.0
    %35 = vadd.xlane.f32.xlu0 %v34
    %v36 = vpop.xlane.xlu0 %35
    %v37 = vrcp.pop 32.0
    %v38 = vmul.f32 %v33, %v37
    %v39 = vmul.f32 %v36, %v37
    %v40 = vadd.f32 %v38, 1e-06
    %v41 = vadd.f32 %v39, 1e-06
    %v42 = vrsqrt.pop %v40
    %v43 = vrsqrt.pop %v41
    %v44 = vld [vmem:[%s1] sm:$0x1]
    %v45 = vmul.f32 %v26, %v42
    %v46 = vmul.f32 %v27, %v43
    %v47 = vadd.f32 %v44, 1.0
    %v49 = vlaneseq
    %v50 = vshrl.u32 %v49, 7
    %v51 = vsub.s32 0, %v50
    %v52 = vrot.slane %v47, %v51
    %v54 = vmul.f32 %v45, %v52
    %v55 = vmul.f32 %v46, %v52
    %56 = vst.msk [vmem:[#allocation5] sm:$0xff] %vm30, %v54
    %57 = vst.msk [vmem:[#allocation5 + $0x8] sm:$0xff] %vm30, %v55
    // Predicated region
    $region14: #{tpu_custom_call.1} parent=1 // pred_check
      _
    $region15: #{tpu_custom_call.1} parent=1 // pred_check_branch
      %59 = sbr.rel (0) target = $region17
    $region16: #{tpu_custom_call.1} parent=1 // pred_region
      %s61 = ssub.s32 256, 256
      %62 = vsyncadd [#allocation4], %s61
      %s63 = sshll.u32 [#allocation5], 4
      %s64 = int_to_ptr.vmem [resolvable:$true] %s63
      %69 = dma.vmem_to_hbm [thread:$0]  %s64, 256, %s2, [#allocation4], 128, 128, 8
    $region17: #{tpu_custom_call.1} parent=1 // pred_fallthru
      _
    // Predicated region
    $region18: #{tpu_custom_call.1} parent=1 // pred_check
      _
    $region19: #{tpu_custom_call.1} parent=1 // pred_check_branch
      %71 = sbr.rel (0) target = $region21
    $region20: #{tpu_custom_call.1} parent=1 // pred_region
      %72 = dma.done [#allocation4], 256
    $region21: #{tpu_custom_call.1} parent=1 // pred_fallthru
      _
    %73 = vsyncpa [#allocation3], 1
    %74 = vsyncpa [#allocation4], 1

</llo_original>
